<compile_context>
chip_gen: v6e
topology: v6e:2x2x1
jax: 0.10.0
libtpu: 0.0.40
codegen_flags: <defaults>
</compile_context>

<pallas_src>
import jax
import jax.numpy as jnp
from jax.experimental import pallas as pl
from jax.experimental.pallas import tpu as pltpu


def _nll_num_kernel(pred_ref, target_ref, weight_ref, out_ref, acc_ref):
    step = pl.program_id(1)

    @pl.when(step == 0)
    def _init():
        acc_ref[...] = jnp.zeros_like(acc_ref)

    pred = pred_ref[...]                      # (tn, C) original dtype (bf16 stays packed)
    tgt = target_ref[...]                     # (tn, 1) int32; -1 on padded / OOB rows

    tn, c = pred.shape
    col_ids = jax.lax.broadcasted_iota(jnp.int32, (tn, c), 1)
    one_hot = col_ids == tgt                  # (tn, C) bool

    # Select-first: masked entries become exactly 0, so -inf / garbage rows in a
    # partial last tile can never reach the sum (no 0 * inf = NaN hazard).
    sel = jnp.where(one_hot, pred, jnp.zeros((), dtype=pred.dtype))

    # Per-step work: a single sublane reduce, accumulated in a lane-wide f32 vector.
    acc_ref[...] += jnp.sum(sel, axis=0, keepdims=True, dtype=jnp.float32)

    @pl.when(step == pl.num_programs(1) - 1)
    def _finalize():
        # Per-class weight applied once per core; single cross-lane reduce here.
        partial = jnp.sum(acc_ref[...] * weight_ref[...])
        out_ref[...] = partial.reshape(1, 1, 1)


def _derive_tile_rows(n, c, itemsize, sublane,
                      target_tile_bytes=2 * 1024 * 1024,
                      transfer_budget_bytes=12 * 1024 * 1024):
    """Pick tile rows so each pred tile is ~2 MiB, double-buffered transfers fit VMEM."""
    row_hbm = max(1, c * itemsize)            # pred row in HBM
    row_vmem = row_hbm + 128 * 4              # + lane-padded (1 -> 128) int32 target row
    tn = max(sublane, target_tile_bytes // row_hbm)
    tn = min(tn, max(sublane, transfer_budget_bytes // (2 * row_vmem)))
    return max(sublane, (tn // sublane) * sublane)


def nll_loss_pallas(pred, target, weight, tile_rows=None, num_cores=2):
    """pred: (N, C) float log-probs, target: (N,) int, weight: (C,) float."""
    n, c = pred.shape
    itemsize = pred.dtype.itemsize
    sublane = {4: 8, 2: 16, 1: 32}.get(itemsize, 8)

    if tile_rows is None:
        tile_rows = _derive_tile_rows(n, c, itemsize, sublane)
    tn = max(sublane, (int(tile_rows) // sublane) * sublane)
    if n >= sublane:
        tn = min(tn, (n // sublane) * sublane)  # keep the block inside the array
    else:
        tn = n                                  # tiny batch: one full-dim block

    num_tiles = -(-n // tn)
    p_cores = max(1, min(int(num_cores), num_tiles))
    steps = -(-num_tiles // p_cores)
    last_tile = num_tiles - 1

    # Pad only the target vector (tiny); -1 matches no class -> contributes 0.
    n_pad = p_cores * steps * tn
    target2d = target.astype(jnp.int32).reshape(n, 1)
    if n_pad != n:
        target2d = jnp.pad(target2d, ((0, n_pad - n), (0, 0)), constant_values=-1)
    weight2d = weight.astype(jnp.float32).reshape(1, c)

    # pred index is clamped so overflow steps (num_tiles % cores != 0) re-read a
    # valid tile; the matching target block is all -1 there, so it adds 0.
    pred_spec = pl.BlockSpec(
        (tn, c), lambda p, i: (jnp.minimum(p * steps + i, last_tile), 0))
    tgt_spec = pl.BlockSpec((tn, 1), lambda p, i: (p * steps + i, 0))
    w_spec = pl.BlockSpec((1, c), lambda p, i: (0, 0))
    out_spec = pl.BlockSpec((1, 1, 1), lambda p, i: (p, 0, 0))

    vmem_needed = 2 * tn * (c * itemsize + 128 * 4) + 4 * c * 4 + (1 << 20)
    vmem_limit = int(min(32 * 1024 * 1024, max(2 * vmem_needed, 16 * 1024 * 1024)))

    partials = pl.pallas_call(
        _nll_num_kernel,
        out_shape=jax.ShapeDtypeStruct((p_cores, 1, 1), jnp.float32),
        grid_spec=pltpu.PrefetchScalarGridSpec(
            num_scalar_prefetch=0,
            grid=(p_cores, steps),
            in_specs=[pred_spec, tgt_spec, w_spec],
            out_specs=out_spec,
            scratch_shapes=[pltpu.VMEM((1, c), jnp.float32)],  # per-core numerator vec
        ),
        compiler_params=pltpu.CompilerParams(
            dimension_semantics=("parallel", "arbitrary"),
            vmem_limit_bytes=vmem_limit,
        ),
        cost_estimate=pl.CostEstimate(
            flops=3 * n * c,
            transcendentals=0,
            bytes_accessed=n * c * itemsize + n * 4 + c * 4,
        ),
    )(pred, target2d, weight2d)

    numerator = jnp.sum(partials[:, 0, 0])
    # Denominator: O(N) gather of per-class weights, done outside the kernel.
    denominator = jnp.sum(weight.astype(jnp.float32)[target])
    return -numerator / denominator


def nll_loss_ref(pred, target, weight):
    # Pure-JAX reference of torch.nn.functional.nll_loss(pred, target, weight=weight)
    pred = pred.astype(jnp.float32)
    w_t = weight.astype(jnp.float32)[target]
    picked = pred[jnp.arange(pred.shape[0]), target]
    return -jnp.sum(w_t * picked) / jnp.sum(w_t)


if __name__ == "__main__":
    key = jax.random.PRNGKey(0)
    k1, k2, k3 = jax.random.split(key, 3)

    N, C = 24, 32  # small batch / class count, consistent with the module's forward
    logits = jax.random.normal(k1, (N, C), dtype=jnp.float32)
    pred = jax.nn.log_softmax(logits, axis=-1)
    target = jax.random.randint(k2, (N,), 0, C, dtype=jnp.int32)
    weight = jax.random.uniform(k3, (C,), jnp.float32, 0.5, 1.5)

    # Inject a -inf log-prob at a non-target entry: the select-first masking must ignore it.
    off_cls = (target[0] + 1) % C
    pred = pred.at[0, off_cls].set(-jnp.inf)

    ref = nll_loss_ref(pred, target, weight)

    # 1) default tiling: single exact tile.
    l1 = nll_loss_pallas(pred, target, weight)
    # 2) tiny tiles: 3 tiles over 2 "cores" -> exercises the clamped overflow step.
    l2 = nll_loss_pallas(pred, target, weight, tile_rows=8)
    # 3) partial last tile (24 % 16 != 0) -> exercises garbage-row masking.
    l3 = nll_loss_pallas(pred, target, weight, tile_rows=16)
    jax.block_until_ready((l1, l2, l3))
    for l in (l1, l2, l3):
        assert jnp.allclose(l, ref, atol=1e-5, rtol=1e-5), (l, ref)

    # 4) bf16 pred path: stays bf16 in HBM/VMEM, accumulated in f32 inside the kernel.
    pred_bf16 = pred.astype(jnp.bfloat16)
    ref_bf = nll_loss_ref(pred_bf16, target, weight)
    l4 = nll_loss_pallas(pred_bf16, target, weight, tile_rows=16)
    jax.block_until_ready(l4)
    assert jnp.allclose(l4, ref_bf, atol=1e-2, rtol=1e-2), (l4, ref_bf)

    print("KERNEL_OK")
</pallas_src>

<mosaic_0001>
module attributes {stable_mosaic.version = 11 : i64} {
  func.func @_nll_num_kernel(%arg0: i32, %arg1: i32, %arg2: memref<24x32xf32, #tpu.memory_space<vmem>>, %arg3: memref<24x1xi32, #tpu.memory_space<vmem>>, %arg4: memref<1x32xf32, #tpu.memory_space<vmem>>, %arg5: memref<1x1x1xf32, #tpu.memory_space<vmem>>, %arg6: memref<1x32xf32, #tpu.memory_space<vmem>>) attributes {dimension_semantics = [#tpu.dimension_semantics<parallel>, #tpu.dimension_semantics<arbitrary>], iteration_bounds = array<i64: 1, 1>, scalar_prefetch = 0 : i64, scratch_operands = 1 : i64, tpu.core_type = #tpu.core_type<tc>, window_params = [{transform_indices = @transform_0, window_bounds = array<i64: 24, 32>}, {transform_indices = @transform_1, window_bounds = array<i64: 24, 1>}, {pipeline_mode = #tpu.pipeline_mode<synchronous>, transform_indices = @transform_2, window_bounds = array<i64: 1, 32>}, {transform_indices = @transform_3, window_bounds = array<i64: 1, 1, 1>}]} {
    %c0_i32 = arith.constant 0 : i32
    %0 = arith.cmpi eq, %arg1, %c0_i32 : i32
    %1 = arith.extui %0 : i1 to i32
    %c0_i32_0 = arith.constant 0 : i32
    %2 = arith.cmpi ne, %1, %c0_i32_0 : i32
    scf.if %2 {
      %cst_11 = arith.constant 0.000000e+00 : f32
      %18 = vector.broadcast %cst_11 : f32 to vector<1x32xf32>
      %c0_12 = arith.constant 0 : index
      %c0_13 = arith.constant 0 : index
      %19 = vector.load %arg6[%c0_12, %c0_13] : memref<1x32xf32, #tpu.memory_space<vmem>>, vector<1x32xf32>
      tpu.vector_store %arg6[%c0_12, %c0_13], %18 {strides = array<i32>} : memref<1x32xf32, #tpu.memory_space<vmem>>, vector<1x32xf32>,
    } else {
    }
    %c0 = arith.constant 0 : index
    %c0_1 = arith.constant 0 : index
    %3 = vector.load %arg2[%c0, %c0_1] : memref<24x32xf32, #tpu.memory_space<vmem>>, vector<24x32xf32>
    %c0_2 = arith.constant 0 : index
    %c0_3 = arith.constant 0 : index
    %4 = vector.load %arg3[%c0_2, %c0_3] : memref<24x1xi32, #tpu.memory_space<vmem>>, vector<24x1xi32>
    %5 = tpu.iota {dimensions = array<i32: 1>} : vector<24x32xi32>
    %6 = vector.broadcast %4 : vector<24x1xi32> to vector<24x32xi32>
    %7 = arith.cmpi eq, %5, %6 : vector<24x32xi32>
    %cst = arith.constant 0.000000e+00 : f32
    %8 = vector.broadcast %cst : f32 to vector<24x32xf32>
    %9 = arith.select %7, %3, %8 : vector<24x32xi1>, vector<24x32xf32>
    %c0_4 = arith.constant 0 : index
    %c0_5 = arith.constant 0 : index
    %10 = vector.load %arg6[%c0_4, %c0_5] : memref<1x32xf32, #tpu.memory_space<vmem>>, vector<1x32xf32>
    %cst_6 = arith.constant dense<0.000000e+00> : vector<32xf32>
    %11 = vector.multi_reduction <add>, %9, %cst_6 [0] : vector<24x32xf32> to vector<32xf32>
    %12 = vector.shape_cast %11 : vector<32xf32> to vector<1x32xf32>
    %13 = arith.addf %10, %12 : vector<1x32xf32>
    %c0_7 = arith.constant 0 : index
    %c0_8 = arith.constant 0 : index
    %14 = vector.load %arg6[%c0_7, %c0_8] : memref<1x32xf32, #tpu.memory_space<vmem>>, vector<1x32xf32>
    tpu.vector_store %arg6[%c0_7, %c0_8], %13 {strides = array<i32>} : memref<1x32xf32, #tpu.memory_space<vmem>>, vector<1x32xf32>,
    %c0_i32_9 = arith.constant 0 : i32
    %15 = arith.cmpi eq, %arg1, %c0_i32_9 : i32
    %16 = arith.extui %15 : i1 to i32
    %c0_i32_10 = arith.constant 0 : i32
    %17 = arith.cmpi ne, %16, %c0_i32_10 : i32
    scf.if %17 {
      %c0_11 = arith.constant 0 : index
      %c0_12 = arith.constant 0 : index
      %18 = vector.load %arg6[%c0_11, %c0_12] : memref<1x32xf32, #tpu.memory_space<vmem>>, vector<1x32xf32>
      %c0_13 = arith.constant 0 : index
      %c0_14 = arith.constant 0 : index
      %19 = vector.load %arg4[%c0_13, %c0_14] : memref<1x32xf32, #tpu.memory_space<vmem>>, vector<1x32xf32>
      %20 = arith.mulf %18, %19 : vector<1x32xf32>
      %21 = vector.shape_cast %20 : vector<1x32xf32> to vector<1x1x32xf32>
      %cst_15 = arith.constant dense<0.000000e+00> : vector<1xf32>
      %22 = vector.multi_reduction <add>, %21, %cst_15 [1, 2] : vector<1x1x32xf32> to vector<1xf32>
      %23 = vector.shape_cast %22 : vector<1xf32> to vector<1x1x1xf32>
      %24 = vector.extract %23[0, 0, 0] : f32 from vector<1x1x1xf32>
      %25 = vector.broadcast %24 : f32 to vector<1x1x1xf32>
      %c0_16 = arith.constant 0 : index
      %c0_17 = arith.constant 0 : index
      %c0_18 = arith.constant 0 : index
      %26 = vector.load %arg5[%c0_16, %c0_17, %c0_18] : memref<1x1x1xf32, #tpu.memory_space<vmem>>, vector<1x1x1xf32>
      tpu.vector_store %arg5[%c0_16, %c0_17, %c0_18], %25 {strides = array<i32>} : memref<1x1x1xf32, #tpu.memory_space<vmem>>, vector<1x1x1xf32>,
    } else {
    }
    return
  }
  func.func @transform_0(%arg0: i32, %arg1: i32) -> (i32, i32) {
    %c1_i32 = arith.constant 1 : i32
    %0 = arith.muli %arg0, %c1_i32 : i32
    %1 = arith.addi %0, %arg1 : i32
    %c0_i32 = arith.constant 0 : i32
    %2 = arith.minsi %1, %c0_i32 : i32
    %c0_i32_0 = arith.constant 0 : i32
    %c0_i32_1 = arith.constant 0 : i32
    return %2, %c0_i32_0 : i32, i32
  }
  func.func @transform_1(%arg0: i32, %arg1: i32) -> (i32, i32) {
    %c1_i32 = arith.constant 1 : i32
    %0 = arith.muli %arg0, %c1_i32 : i32
    %1 = arith.addi %0, %arg1 : i32
    %c0_i32 = arith.constant 0 : i32
    %c0_i32_0 = arith.constant 0 : i32
    return %1, %c0_i32 : i32, i32
  }
  func.func @transform_2(%arg0: i32, %arg1: i32) -> (i32, i32) {
    %c0_i32 = arith.constant 0 : i32
    %c0_i32_0 = arith.constant 0 : i32
    %c0_i32_1 = arith.constant 0 : i32
    return %c0_i32, %c0_i32_0 : i32, i32
  }
  func.func @transform_3(%arg0: i32, %arg1: i32) -> (i32, i32, i32) {
    %c0_i32 = arith.constant 0 : i32
    %c0_i32_0 = arith.constant 0 : i32
    %c0_i32_1 = arith.constant 0 : i32
    return %arg0, %c0_i32, %c0_i32_0 : i32, i32, i32
  }
}

</mosaic_0001>

<llo_original>
// kernel: tpu_custom_call.1
$region0: #{tpu_custom_call.1}
  #allocation0 [shape = 'u32[]', space=smem, size = 0x4, offset = 0x4, fixed_abs, tag = 'smem constant byte address 0x4 - core index']
  #allocation1 [shape = 'u32[144,128]{1,0:T(1,128)}', space=vmem, size = 0x12000, scoped, tag = 'internal scratch']
  #allocation2 [shape = 'f32[1,32]{1,0:T(1,128)}', space=vmem, size = 0x200, scoped, tag = 'scratch operand']
  %s0 = inlined_call_operand.vmem [shape: f32[24,32], index: 0, kind: input, shape index: {}]
  %s1 = inlined_call_operand.vmem [shape: s32[24,1], index: 1, kind: input, shape index: {}]
  %s2 = inlined_call_operand.vmem [shape: f32[1,32], index: 2, kind: input, shape index: {}]
  %s3 = inlined_call_operand.hbm [shape: f32[1,1,1], index: 3, kind: output, shape index: {}]
  %s4 = sld [smem:[#allocation0]]
  $region30: #{tpu_custom_call.1} parent=0
    _
  %s6 = ssub.s32 1, %s4
  %s7 = scalar_select 0, %s6, %s4
  $region1: #{tpu_custom_call.1} parent=0
    #allocation3 [shape = 'u8[512]{0}', space=vmem, size = 0x400, scoped, tag = 'output window, operand 0, single buffered']
    #allocation4 [shape = 's32[1]{0}', space=sflag, size = 0x4, scoped, tag = 'scoped memory for tpu_custom_call.1']
    %8 = vsyncpa [#allocation4], 0
    // Predicated region
    $region2: #{tpu_custom_call.1} parent=1 // pred_check
      _
    $region3: #{tpu_custom_call.1} parent=1 // pred_check_branch
      %10 = sbr.rel (0) target = $region5
    $region4: #{tpu_custom_call.1} parent=1 // pred_region
      %s11 = sadd.s32 0, 0
      %p12 = scmp.lt.s32.totalorder %s11, 0
      %s13 = scalar_select %p12, %s11, 0
      %s14 = smul.u32 3, %s13
      %p15 = scmp.lt.s32.totalorder %s14, 2
      %s16 = scalar_select %p15, %s14, 2
      %s17 = smul.addr %s16, 8
      %s18 = scalar_lea.vmem %s0, %s17
      %s19 = sadd.s32 0, 0
      %p20 = scmp.lt.s32.totalorder %s19, 0
      %s21 = scalar_select %p20, %s19, 0
      %s22 = smul.u32 3, %s21
    $region5: #{tpu_custom_call.1} parent=1 // pred_fallthru
      _
    // Predicated region
    $region6: #{tpu_custom_call.1} parent=1 // pred_check
      _
    $region7: #{tpu_custom_call.1} parent=1 // pred_check_branch
      %24 = sbr.rel (0) target = $region9
    $region8: #{tpu_custom_call.1} parent=1 // pred_region
      %s25 = sadd.s32 0, 0
      %s26 = smul.u32 3, %s25
      %p27 = scmp.lt.s32.totalorder %s26, 2
      %s28 = scalar_select %p27, %s26, 2
      %s29 = smul.addr %s28, 8
      %s30 = scalar_lea.vmem %s1, %s29
      %s31 = sadd.s32 0, 0
      %s32 = smul.u32 3, %s31
    $region9: #{tpu_custom_call.1} parent=1 // pred_fallthru
      _
    // Predicated region
    $region10: #{tpu_custom_call.1} parent=1 // pred_check
      _
    $region11: #{tpu_custom_call.1} parent=1 // pred_check_branch
      %34 = sbr.rel (0) target = $region13
    $region12: #{tpu_custom_call.1} parent=1 // pred_region
      _
    $region13: #{tpu_custom_call.1} parent=1 // pred_fallthru
      _
    %s35 = sadd.s32 0, 0
    %p36 = scmp.lt.s32.totalorder %s35, 0
    %s37 = scalar_select %p36, %s35, 0
    %s38 = smul.u32 3, %s37
    %p39 = scmp.lt.s32.totalorder %s38, 2
    %s40 = scalar_select %p39, %s38, 2
    %s41 = smul.addr %s40, 8
    %s42 = scalar_lea.vmem %s0, %s41
    %s43 = sadd.s32 0, 0
    %s44 = smul.u32 3, %s43
    %p45 = scmp.lt.s32.totalorder %s44, 2
    %s46 = scalar_select %p45, %s44, 2
    %s47 = smul.addr %s46, 8
    %s48 = scalar_lea.vmem %s1, %s47
    %s49 = sadd.s32 0, 0
    %p50 = scmp.lt.s32.totalorder %s49, 0
    %s51 = scalar_select %p50, %s49, 0
    %s52 = smul.u32 3, %s51
    %p53 = scmp.lt.s32.totalorder %s52, 2
    %s54 = scalar_select %p53, %s52, 2
    %s55 = smul.addr %s54, 8
    %s56 = scalar_lea.vmem %s0, %s55
    %s57 = sadd.s32 0, 0
    %p58 = scmp.lt.s32.totalorder %s57, 0
    %s59 = scalar_select %p58, %s57, 0
    %s60 = smul.u32 3, %s59
    %s61 = sadd.s32 0, 0
    %s62 = smul.u32 3, %s61
    %p63 = scmp.lt.s32.totalorder %s62, 2
    %s64 = scalar_select %p63, %s62, 2
    %s65 = smul.addr %s64, 8
    %s66 = scalar_lea.vmem %s1, %s65
    %s67 = sadd.s32 0, 0
    %s68 = smul.u32 3, %s67
    %p69 = scmp.eq.s32.totalorder 0, 0
    // Predicated region
    $region14: #{tpu_custom_call.1} parent=1 // pred_check
      %p70 = pneg %p69
    $region15: #{tpu_custom_call.1} parent=1 // pred_check_branch
      %72 = sbr.rel (%p70) target = $region17
    $region16: #{tpu_custom_call.1} parent=1 // pred_region
      %vm73 = vcmask 253952
      %74 = vst.msk [vmem:[#allocation2] sm:$0x1] %vm73, 0.0
    $region17: #{tpu_custom_call.1} parent=1 // pred_fallthru
      _
    %v75 = vld [vmem:[%s56] sm:$0xff]
    %v76 = vld [vmem:[%s56 + $0x8] sm:$0xff]
    %v77 = vld [vmem:[%s56 + $0x10] sm:$0xff]
    %v78 = vld [vmem:[%s66] sm:$0xff]
    %v79 = vld [vmem:[%s66 + $0x8] sm:$0xff]
    %v80 = vld [vmem:[%s66 + $0x10] sm:$0xff]
    %v81 = vlaneseq
    %v82 = vand.u32 %v81, 127
    %83 = vset.pattern.permute.xlu0 0
    %84 = vperm.xlu0 %83, %v78
    %v85 = vpop.permute.xlu0 %84
    %86 = vset.pattern.permute.xlu0 0
    %87 = vperm.xlu0 %86, %v79
    %v88 = vpop.permute.xlu0 %87
    %89 = vset.pattern.permute.xlu0 0
    %90 = vperm.xlu0 %89, %v80
    %v91 = vpop.permute.xlu0 %90
    %vm92 = vcmp.eq.s32.totalorder %v82, %v85
    %vm93 = vcmp.eq.s32.totalorder %v82, %v88
    %vm94 = vcmp.eq.s32.totalorder %v82, %v91
    %v95 = vsel %vm92, %v75, 0.0
    %v96 = vsel %vm93, %v76, 0.0
    %v97 = vsel %vm94, %v77, 0.0
    %v98 = vld [vmem:[#allocation2] sm:$0x1]
    %vm99 = vcmask 261120
    %v100 = vsel %vm99, %v95, 0.0
    %v101 = vsel %vm99, %v96, 0.0
    %v102 = vadd.f32 %v100, %v101
    %v103 = vsel %vm99, %v97, 0.0
    %v104 = vadd.f32 %v102, %v103
    %v105 = vrot.slane %v104, 4
    %v106 = vadd.f32 %v104, %v105
    %v107 = vrot.slane %v106, 2
    %v108 = vadd.f32 %v106, %v107
    %v109 = vrot.slane %v108, 1
    %v110 = vadd.f32 %v108, %v109
    %v111 = vadd.f32 %v98, %v110
    %vm112 = vcmask 253952
    %113 = vst.msk [vmem:[#allocation2] sm:$0x1] %vm112, %v111
    // Predicated region
    $region18: #{tpu_custom_call.1} parent=1 // pred_check
      %p114 = pneg %p69
    $region19: #{tpu_custom_call.1} parent=1 // pred_check_branch
      %116 = sbr.rel (%p114) target = $region21
    $region20: #{tpu_custom_call.1} parent=1 // pred_region
      %v117 = vld [vmem:[#allocation2] sm:$0x1]
      %v118 = vld [vmem:[%s2] sm:$0x1]
      %v119 = vmul.f32 %v117, %v118
      %v120 = vsel %vm112, %v119, 0.0
      %121 = vadd.xlane.f32.xlu0 %v120
      %v122 = vpop.xlane.xlu0 %121
      %v123 = vrot.slane %v122, 4
      %v124 = vadd.f32 %v122, %v123
      %v125 = vrot.slane %v124, 2
      %v126 = vadd.f32 %v124, %v125
      %v127 = vrot.slane %v126, 1
      %v128 = vadd.f32 %v126, %v127
      %s129 = vtos %v128
      %v130 = vstv %s129
      %vm131 = vcmask 0
      %132 = vst.msk [vmem:[#allocation3] sm:$0x1] %vm131, %v130
    $region21: #{tpu_custom_call.1} parent=1 // pred_fallthru
      _
    // Predicated region
    $region22: #{tpu_custom_call.1} parent=1 // pred_check
      _
    $region23: #{tpu_custom_call.1} parent=1 // pred_check_branch
      %134 = sbr.rel (0) target = $region25
    $region24: #{tpu_custom_call.1} parent=1 // pred_region
      %s136 = ssub.s32 16, 16
      %137 = vsyncadd [#allocation4], %s136
      %s139 = sshll.u32 [#allocation3], 4
      %s140 = int_to_ptr.vmem [resolvable:$true] %s139
      %142 = dma.vmem_to_hbm [thread:$0]  %s140, 16, %s3, [#allocation4]
    $region25: #{tpu_custom_call.1} parent=1 // pred_fallthru
      _
    // Predicated region
    $region26: #{tpu_custom_call.1} parent=1 // pred_check
      _
    $region27: #{tpu_custom_call.1} parent=1 // pred_check_branch
      %144 = sbr.rel (0) target = $region29
    $region28: #{tpu_custom_call.1} parent=1 // pred_region
      %145 = dma.done [#allocation4], 16
    $region29: #{tpu_custom_call.1} parent=1 // pred_fallthru
      _
    %146 = vsyncpa [#allocation4], 1

</llo_original>
